<compile_context>
chip_gen: v5e
topology: v5e:2x2
jax: 0.10.0
libtpu: 0.0.40
codegen_flags: <defaults>
</compile_context>

<pallas_src>
import functools

import jax
import jax.numpy as jnp
from jax import lax
from jax.experimental import pallas as pl
from jax.experimental.pallas import tpu as pltpu


def mlp_kernel(x_ref, w_ref, b_ref, o_ref, *, out_size):
    # x_ref : (in_length, TB) f32   -- feature on sublanes, batch block on lanes
    # w_ref : (in_length + 2*W, W) bf16 packed [W1p ; W2p ; Wo_fused_p]
    # b_ref : (3, W) f32 packed rows [b1p ; b2p ; bo_fused_p]
    # o_ref : (TB, W) f32 lane-dense output slab (heads in lanes [0, 2*out))
    in_len = x_ref.shape[0]
    W = w_ref.shape[1]

    w1 = w_ref[0:in_len, :]                       # (in_len, W)
    w2 = w_ref[in_len:in_len + W, :]              # (W, W)
    wo = w_ref[in_len + W:in_len + 2 * W, :]      # (W, W)
    b1 = b_ref[0:1, :]
    b2 = b_ref[1:2, :]
    bo = b_ref[2:3, :]

    # (TB, in_len) <- XLU transpose of the f32 block; leading ReLU; bf16 for MXU.
    h = jnp.maximum(jnp.transpose(x_ref[...]), 0.0).astype(jnp.bfloat16)
    h = jnp.dot(h, w1, preferred_element_type=jnp.float32) + b1
    h = jnp.maximum(h, 0.0).astype(jnp.bfloat16)
    h = (jnp.dot(h, w2, preferred_element_type=jnp.float32) + b2).astype(jnp.bfloat16)
    z = jnp.dot(h, wo, preferred_element_type=jnp.float32) + bo       # (TB, W) f32

    # Segment-masked two-head softmax over lanes [0, out) and [out, 2*out):
    # no sub-lane slices, no concatenate; padded lanes (>= 2*out) produce 0.
    lane = lax.broadcasted_iota(jnp.int32, z.shape, 1)
    in_h1 = lane < out_size
    in_h2 = jnp.logical_and(lane >= out_size, lane < 2 * out_size)
    valid = jnp.logical_or(in_h1, in_h2)
    neg = jnp.float32(-1e30)

    m1 = jnp.max(jnp.where(in_h1, z, neg), axis=-1, keepdims=True)
    m2 = jnp.max(jnp.where(in_h2, z, neg), axis=-1, keepdims=True)
    m = jnp.where(in_h1, m1, m2)
    e = jnp.exp(jnp.where(valid, z - m, neg))      # exp(-1e30) -> 0 on pad lanes
    s1 = jnp.sum(jnp.where(in_h1, e, 0.0), axis=-1, keepdims=True)
    s2 = jnp.sum(jnp.where(in_h2, e, 0.0), axis=-1, keepdims=True)
    s = jnp.where(in_h1, s1, s2)
    o_ref[...] = e * pl.reciprocal(s, approx=True)


def mlp_module_forward(x, params, *, block_batch=256):
    """x: (in_length, batch, 1) float32, matching the PyTorch forward."""
    in_length, batch, _ = x.shape
    out_size = params["out_size"]
    wblob, bias = params["wblob"], params["bias"]
    k_total, W = wblob.shape

    x2d = jnp.squeeze(x, -1)                      # (in_length, B), layout-preserving

    if batch <= block_batch:
        TB, Bp = batch, batch                     # single grid step, full-dim block
    else:
        TB = block_batch                          # multiple of 128 -> legal x block
        Bp = ((batch + TB - 1) // TB) * TB
        if Bp != batch:
            x2d = jnp.pad(x2d, ((0, 0), (0, Bp - batch)))
    grid = (Bp // TB,)

    kernel = functools.partial(mlp_kernel, out_size=out_size)
    flops = 2 * Bp * (in_length * W + W * W + W * W)
    cost = pl.CostEstimate(
        flops=flops,
        transcendentals=Bp * W,
        bytes_accessed=int(x2d.size) * 4 + int(wblob.size) * 2
        + int(bias.size) * 4 + Bp * W * 4,
    )

    z = pl.pallas_call(
        kernel,
        out_shape=jax.ShapeDtypeStruct((Bp, W), jnp.float32),
        grid=grid,
        in_specs=[
            pl.BlockSpec((in_length, TB), lambda i: (0, i)),     # x block per step
            pl.BlockSpec((k_total, W), lambda i: (0, 0)),        # weights: resident
            pl.BlockSpec((3, W), lambda i: (0, 0)),              # biases: resident
        ],
        out_specs=pl.BlockSpec((TB, W), lambda i: (i, 0)),
        compiler_params=pltpu.CompilerParams(dimension_semantics=("parallel",)),
        cost_estimate=cost,
    )(x2d, wblob, bias)

    return z[:batch, :out_size], z[:batch, out_size:2 * out_size]


def init_params(key, in_length=128, hidden_layers=(64, 128), out_size=6):
    """nn.Linear-style init (uniform +/- 1/sqrt(fan_in)). Weights stored
    transposed as (in, out), zero-padded to a common lane-rounded width W,
    output heads fused, everything packed into one bf16 weight blob and one
    f32 bias blob. Zero padding is numerically exact (ReLU(0)=0, zero rows /
    columns contribute nothing)."""
    def linear(k, fan_in, fan_out):
        kw, kb = jax.random.split(k)
        bound = float(fan_in) ** -0.5
        w = jax.random.uniform(kw, (fan_in, fan_out), jnp.float32, -bound, bound)
        b = jax.random.uniform(kb, (fan_out,), jnp.float32, -bound, bound)
        return w, b

    h1, h2 = hidden_layers
    k1, k2, k3, k4 = jax.random.split(key, 4)
    w1, b1 = linear(k1, in_length, h1)
    w2, b2 = linear(k2, h1, h2)
    wo1, bo1 = linear(k3, h2, out_size)
    wo2, bo2 = linear(k4, h2, out_size)

    out2 = 2 * out_size
    W = max(h1, h2, out2)
    W = ((W + 127) // 128) * 128                  # lane-rounded common width
    assert out2 <= W, "fused head width must fit the packed lane width"

    def pad_to(a, shape):
        return jnp.pad(a, [(0, shape[i] - a.shape[i]) for i in range(a.ndim)])

    w1p = pad_to(w1, (in_length, W))
    w2p = pad_to(w2, (W, W))
    wop = pad_to(jnp.concatenate([wo1, wo2], axis=1), (W, W))
    wblob = jnp.concatenate([w1p, w2p, wop], axis=0).astype(jnp.bfloat16)

    bias = jnp.stack(
        [pad_to(b1, (W,)), pad_to(b2, (W,)),
         pad_to(jnp.concatenate([bo1, bo2], axis=0), (W,))], axis=0)  # (3, W) f32

    raw = dict(w1=w1, b1=b1, w2=w2, b2=b2, wo1=wo1, bo1=bo1, wo2=wo2, bo2=bo2)
    return dict(wblob=wblob, bias=bias, raw=raw,
                in_length=in_length, width=W, out_size=out_size)


def kernel_precision_reference(x, params):
    """Pure-JAX reference with the SAME precision as the kernel
    (bf16 operands, f32 accumulation) but exact softmax."""
    in_length, W, out = params["in_length"], params["width"], params["out_size"]
    wb, bias = params["wblob"], params["bias"]
    w1 = wb[0:in_length]
    w2 = wb[in_length:in_length + W]
    wo = wb[in_length + W:in_length + 2 * W]
    b1, b2, bo = bias[0], bias[1], bias[2]
    xb = jnp.transpose(jnp.squeeze(x, -1))
    h = jnp.maximum(xb, 0.0).astype(jnp.bfloat16)
    h = jnp.dot(h, w1, preferred_element_type=jnp.float32) + b1
    h = jnp.maximum(h, 0.0).astype(jnp.bfloat16)
    h = (jnp.dot(h, w2, preferred_element_type=jnp.float32) + b2).astype(jnp.bfloat16)
    z = jnp.dot(h, wo, preferred_element_type=jnp.float32) + bo
    return (jax.nn.softmax(z[:, :out], axis=-1),
            jax.nn.softmax(z[:, out:2 * out], axis=-1))


def f32_reference(x, params):
    """Pure-f32 reference of the original PyTorch forward."""
    r = params["raw"]
    xb = jnp.transpose(jnp.squeeze(x, -1))
    h = jnp.maximum(xb, 0.0)
    h = jnp.maximum(h @ r["w1"] + r["b1"], 0.0)
    h = h @ r["w2"] + r["b2"]
    return (jax.nn.softmax(h @ r["wo1"] + r["bo1"], axis=-1),
            jax.nn.softmax(h @ r["wo2"] + r["bo2"], axis=-1))


if __name__ == "__main__":
    in_length, hidden_layers, out_size = 128, (64, 128), 6
    key = jax.random.PRNGKey(0)
    kx, kp, kx2 = jax.random.split(key, 3)
    params = init_params(kp, in_length, hidden_layers, out_size)

    # --- small batch (single grid step), PyTorch input convention (in, B, 1) ---
    batch = 8
    x = jax.random.normal(kx, (in_length, batch, 1), jnp.float32)
    o1, o2 = mlp_module_forward(x, params)
    jax.block_until_ready((o1, o2))

    r1, r2 = kernel_precision_reference(x, params)
    f1, f2 = f32_reference(x, params)
    assert o1.shape == (batch, out_size) and o2.shape == (batch, out_size)
    # tight vs precision-matched reference (approx reciprocal ~1e-3)
    assert jnp.allclose(o1, r1, atol=5e-3) and jnp.allclose(o2, r2, atol=5e-3)
    # loose vs pure-f32 PyTorch-semantics reference (bf16 operand error)
    assert jnp.allclose(o1, f1, atol=5e-2) and jnp.allclose(o2, f2, atol=5e-2)
    assert jnp.allclose(jnp.sum(o1, axis=-1), 1.0, atol=1e-2)
    assert jnp.allclose(jnp.sum(o2, axis=-1), 1.0, atol=1e-2)

    # --- larger batch exercising the batch-parallel grid (2 steps of 256) ---
    batch2 = 512
    x2 = jax.random.normal(kx2, (in_length, batch2, 1), jnp.float32)
    p1, p2 = mlp_module_forward(x2, params)
    jax.block_until_ready((p1, p2))
    q1, q2 = kernel_precision_reference(x2, params)
    assert p1.shape == (batch2, out_size) and p2.shape == (batch2, out_size)
    assert jnp.allclose(p1, q1, atol=5e-3) and jnp.allclose(p2, q2, atol=5e-3)

    print("KERNEL_OK")
</pallas_src>

<mosaic_0001>
module attributes {stable_mosaic.version = 11 : i64} {
  func.func @mlp_kernel(%arg0: i32, %arg1: memref<128x8xf32, #tpu.memory_space<vmem>>, %arg2: memref<384x128xbf16, #tpu.memory_space<vmem>>, %arg3: memref<3x128xf32, #tpu.memory_space<vmem>>, %arg4: memref<8x128xf32, #tpu.memory_space<vmem>>) attributes {dimension_semantics = [#tpu.dimension_semantics<parallel>], iteration_bounds = array<i64: 1>, scalar_prefetch = 0 : i64, scratch_operands = 0 : i64, tpu.core_type = #tpu.core_type<tc>, window_params = [{transform_indices = @transform_0, window_bounds = array<i64: 128, 8>}, {pipeline_mode = #tpu.pipeline_mode<synchronous>, transform_indices = @transform_1, window_bounds = array<i64: 384, 128>}, {pipeline_mode = #tpu.pipeline_mode<synchronous>, transform_indices = @transform_2, window_bounds = array<i64: 3, 128>}, {transform_indices = @transform_3, window_bounds = array<i64: 8, 128>}]} {
    %c0 = arith.constant 0 : index
    %c0_0 = arith.constant 0 : index
    %0 = vector.load %arg2[%c0, %c0_0] : memref<384x128xbf16, #tpu.memory_space<vmem>>, vector<128x128xbf16>
    %c128 = arith.constant 128 : index
    %c0_1 = arith.constant 0 : index
    %1 = vector.load %arg2[%c128, %c0_1] : memref<384x128xbf16, #tpu.memory_space<vmem>>, vector<128x128xbf16>
    %c256 = arith.constant 256 : index
    %c0_2 = arith.constant 0 : index
    %2 = vector.load %arg2[%c256, %c0_2] : memref<384x128xbf16, #tpu.memory_space<vmem>>, vector<128x128xbf16>
    %c0_3 = arith.constant 0 : index
    %c0_4 = arith.constant 0 : index
    %3 = vector.load %arg3[%c0_3, %c0_4] : memref<3x128xf32, #tpu.memory_space<vmem>>, vector<1x128xf32>
    %c1 = arith.constant 1 : index
    %c0_5 = arith.constant 0 : index
    %4 = vector.load %arg3[%c1, %c0_5] : memref<3x128xf32, #tpu.memory_space<vmem>>, vector<1x128xf32>
    %c2 = arith.constant 2 : index
    %c0_6 = arith.constant 0 : index
    %5 = vector.load %arg3[%c2, %c0_6] : memref<3x128xf32, #tpu.memory_space<vmem>>, vector<1x128xf32>
    %c0_7 = arith.constant 0 : index
    %c0_8 = arith.constant 0 : index
    %6 = vector.load %arg1[%c0_7, %c0_8] : memref<128x8xf32, #tpu.memory_space<vmem>>, vector<128x8xf32>
    %7 = tpu.transpose %6, [1, 0] : vector<128x8xf32> -> vector<8x128xf32>
    %cst = arith.constant 0.000000e+00 : f32
    %8 = vector.broadcast %cst : f32 to vector<8x128xf32>
    %9 = arith.maximumf %7, %8 : vector<8x128xf32>
    %10 = arith.truncf %9 : vector<8x128xf32> to vector<8x128xbf16>
    %cst_9 = arith.constant dense<0.000000e+00> : vector<8x128xf32>
    %11 = tpu.matmul %10, %0, %cst_9 {dimension_numbers = #tpu.dot_dimension_numbers<[1], [0], [0], [1], [0, 0, 1, 1], [], []>} : vector<8x128xbf16>, vector<128x128xbf16>, vector<8x128xf32> -> vector<8x128xf32>
    %12 = vector.broadcast %3 : vector<1x128xf32> to vector<8x128xf32>
    %13 = arith.addf %11, %12 : vector<8x128xf32>
    %cst_10 = arith.constant 0.000000e+00 : f32
    %14 = vector.broadcast %cst_10 : f32 to vector<8x128xf32>
    %15 = arith.maximumf %13, %14 : vector<8x128xf32>
    %16 = arith.truncf %15 : vector<8x128xf32> to vector<8x128xbf16>
    %cst_11 = arith.constant dense<0.000000e+00> : vector<8x128xf32>
    %17 = tpu.matmul %16, %1, %cst_11 {dimension_numbers = #tpu.dot_dimension_numbers<[1], [0], [0], [1], [0, 0, 1, 1], [], []>} : vector<8x128xbf16>, vector<128x128xbf16>, vector<8x128xf32> -> vector<8x128xf32>
    %18 = vector.broadcast %4 : vector<1x128xf32> to vector<8x128xf32>
    %19 = arith.addf %17, %18 : vector<8x128xf32>
    %20 = arith.truncf %19 : vector<8x128xf32> to vector<8x128xbf16>
    %cst_12 = arith.constant dense<0.000000e+00> : vector<8x128xf32>
    %21 = tpu.matmul %20, %2, %cst_12 {dimension_numbers = #tpu.dot_dimension_numbers<[1], [0], [0], [1], [0, 0, 1, 1], [], []>} : vector<8x128xbf16>, vector<128x128xbf16>, vector<8x128xf32> -> vector<8x128xf32>
    %22 = vector.broadcast %5 : vector<1x128xf32> to vector<8x128xf32>
    %23 = arith.addf %21, %22 : vector<8x128xf32>
    %24 = tpu.iota {dimensions = array<i32: 1>} : vector<8x128xi32>
    %c6_i32 = arith.constant 6 : i32
    %25 = vector.broadcast %c6_i32 : i32 to vector<8x128xi32>
    %26 = arith.cmpi slt, %24, %25 : vector<8x128xi32>
    %c6_i32_13 = arith.constant 6 : i32
    %27 = vector.broadcast %c6_i32_13 : i32 to vector<8x128xi32>
    %28 = arith.cmpi sge, %24, %27 : vector<8x128xi32>
    %c12_i32 = arith.constant 12 : i32
    %29 = vector.broadcast %c12_i32 : i32 to vector<8x128xi32>
    %30 = arith.cmpi slt, %24, %29 : vector<8x128xi32>
    %31 = arith.andi %28, %30 : vector<8x128xi1>
    %32 = arith.ori %26, %31 : vector<8x128xi1>
    %cst_14 = arith.constant -1.000000e+30 : f32
    %33 = vector.broadcast %cst_14 : f32 to vector<8x128xf32>
    %34 = arith.select %26, %23, %33 : vector<8x128xi1>, vector<8x128xf32>
    %cst_15 = arith.constant dense<0xFF800000> : vector<8xf32>
    %35 = vector.multi_reduction <maximumf>, %34, %cst_15 [1] : vector<8x128xf32> to vector<8xf32>
    %36 = vector.shape_cast %35 : vector<8xf32> to vector<8x1xf32>
    %cst_16 = arith.constant -1.000000e+30 : f32
    %37 = vector.broadcast %cst_16 : f32 to vector<8x128xf32>
    %38 = arith.select %31, %23, %37 : vector<8x128xi1>, vector<8x128xf32>
    %cst_17 = arith.constant dense<0xFF800000> : vector<8xf32>
    %39 = vector.multi_reduction <maximumf>, %38, %cst_17 [1] : vector<8x128xf32> to vector<8xf32>
    %40 = vector.shape_cast %39 : vector<8xf32> to vector<8x1xf32>
    %41 = vector.shape_cast %36 : vector<8x1xf32> to vector<8x1xf32>
    %42 = vector.broadcast %41 : vector<8x1xf32> to vector<8x128xf32>
    %43 = vector.shape_cast %40 : vector<8x1xf32> to vector<8x1xf32>
    %44 = vector.broadcast %43 : vector<8x1xf32> to vector<8x128xf32>
    %45 = arith.select %26, %42, %44 : vector<8x128xi1>, vector<8x128xf32>
    %46 = arith.subf %23, %45 : vector<8x128xf32>
    %cst_18 = arith.constant -1.000000e+30 : f32
    %47 = vector.broadcast %cst_18 : f32 to vector<8x128xf32>
    %48 = arith.select %32, %46, %47 : vector<8x128xi1>, vector<8x128xf32>
    %49 = math.exp %48 : vector<8x128xf32>
    %cst_19 = arith.constant 0.000000e+00 : f32
    %50 = vector.broadcast %cst_19 : f32 to vector<8x128xf32>
    %51 = arith.select %26, %49, %50 : vector<8x128xi1>, vector<8x128xf32>
    %cst_20 = arith.constant dense<0.000000e+00> : vector<8xf32>
    %52 = vector.multi_reduction <add>, %51, %cst_20 [1] : vector<8x128xf32> to vector<8xf32>
    %53 = vector.shape_cast %52 : vector<8xf32> to vector<8x1xf32>
    %cst_21 = arith.constant 0.000000e+00 : f32
    %54 = vector.broadcast %cst_21 : f32 to vector<8x128xf32>
    %55 = arith.select %31, %49, %54 : vector<8x128xi1>, vector<8x128xf32>
    %cst_22 = arith.constant dense<0.000000e+00> : vector<8xf32>
    %56 = vector.multi_reduction <add>, %55, %cst_22 [1] : vector<8x128xf32> to vector<8xf32>
    %57 = vector.shape_cast %56 : vector<8xf32> to vector<8x1xf32>
    %58 = vector.shape_cast %53 : vector<8x1xf32> to vector<8x1xf32>
    %59 = vector.broadcast %58 : vector<8x1xf32> to vector<8x128xf32>
    %60 = vector.shape_cast %57 : vector<8x1xf32> to vector<8x1xf32>
    %61 = vector.broadcast %60 : vector<8x1xf32> to vector<8x128xf32>
    %62 = arith.select %26, %59, %61 : vector<8x128xi1>, vector<8x128xf32>
    %63 = tpu.reciprocal %62 {approx = true} : vector<8x128xf32> -> vector<8x128xf32>
    %64 = arith.mulf %49, %63 : vector<8x128xf32>
    %c0_23 = arith.constant 0 : index
    %c0_24 = arith.constant 0 : index
    %65 = vector.load %arg4[%c0_23, %c0_24] : memref<8x128xf32, #tpu.memory_space<vmem>>, vector<8x128xf32>
    tpu.vector_store %arg4[%c0_23, %c0_24], %64 {strides = array<i32>} : memref<8x128xf32, #tpu.memory_space<vmem>>, vector<8x128xf32>,
    return
  }
  func.func @transform_0(%arg0: i32) -> (i32, i32) {
    %c0_i32 = arith.constant 0 : i32
    %c0_i32_0 = arith.constant 0 : i32
    return %c0_i32, %arg0 : i32, i32
  }
  func.func @transform_1(%arg0: i32) -> (i32, i32) {
    %c0_i32 = arith.constant 0 : i32
    %c0_i32_0 = arith.constant 0 : i32
    %c0_i32_1 = arith.constant 0 : i32
    return %c0_i32, %c0_i32_0 : i32, i32
  }
  func.func @transform_2(%arg0: i32) -> (i32, i32) {
    %c0_i32 = arith.constant 0 : i32
    %c0_i32_0 = arith.constant 0 : i32
    %c0_i32_1 = arith.constant 0 : i32
    return %c0_i32, %c0_i32_0 : i32, i32
  }
  func.func @transform_3(%arg0: i32) -> (i32, i32) {
    %c0_i32 = arith.constant 0 : i32
    %c0_i32_0 = arith.constant 0 : i32
    return %arg0, %c0_i32 : i32, i32
  }
}

</mosaic_0001>

<llo_original>
// kernel: tpu_custom_call.1
$region0: #{tpu_custom_call.1}
  #allocation0 [shape = 'u32[]', space=smem, size = 0x4, offset = 0x4, fixed_abs, tag = 'smem constant byte address 0x4 - core index']
  #allocation1 [shape = 'u32[72,128]{1,0:T(1,128)}', space=vmem, size = 0x9000, scoped, tag = 'internal scratch']
  %s0 = inlined_call_operand.vmem [shape: f32[128,8], index: 0, kind: input, shape index: {}]
  %s1 = inlined_call_operand.hbm [shape: bf16[384,128], index: 1, kind: input, shape index: {}]
  %s2 = inlined_call_operand.vmem [shape: f32[3,128], index: 2, kind: input, shape index: {}]
  %s3 = inlined_call_operand.hbm [shape: f32[8,128], index: 3, kind: output, shape index: {}]
  %s4 = sld [smem:[#allocation0]]
  $region26: #{tpu_custom_call.1} parent=0
    _
  %s6 = ssub.s32 1, %s4
  %s7 = scalar_select 0, %s6, %s4
  $region1: #{tpu_custom_call.1} parent=0
    #allocation2 [shape = 'u8[98304]{0}', space=vmem, size = 0x18000, scoped, tag = 'input window, operand 1, single buffered']
    #allocation3 [shape = 's32[1]{0}', space=sflag, size = 0x4, scoped, tag = 'scoped memory for tpu_custom_call.1']
    #allocation4 [shape = 's32[1]{0}', space=sflag, size = 0x4, scoped, tag = 'scoped memory for tpu_custom_call.1']
    #allocation5 [shape = 'u8[4096]{0}', space=vmem, size = 0x1000, scoped, tag = 'output window, operand 0, single buffered']
    %8 = vsyncpa [#allocation3], 0
    %9 = vsyncpa [#allocation4], 0
    // Predicated region
    $region2: #{tpu_custom_call.1} parent=1 // pred_check
      _
    $region3: #{tpu_custom_call.1} parent=1 // pred_check_branch
      %11 = sbr.rel (0) target = $region5
    $region4: #{tpu_custom_call.1} parent=1 // pred_region
      _
    $region5: #{tpu_custom_call.1} parent=1 // pred_fallthru
      _
    // Predicated region
    $region6: #{tpu_custom_call.1} parent=1 // pred_check
      _
    $region7: #{tpu_custom_call.1} parent=1 // pred_check_branch
      %13 = sbr.rel (0) target = $region9
    $region8: #{tpu_custom_call.1} parent=1 // pred_region
      %15 = vsyncadd [#allocation3], 0
      %s16 = sshll.u32 %s1, 4
      %s17 = int_to_ptr.hbm [resolvable:$true] %s16
      %s18 = sshll.u32 [#allocation2], 4
      %s19 = int_to_ptr.vmem [resolvable:$true] %s18
      %24 = dma.hbm_to_vmem [thread:$0]  %s17, 3072, %s19, [#allocation3], 64, 64, 4
    $region9: #{tpu_custom_call.1} parent=1 // pred_fallthru
      _
    // Predicated region
    $region10: #{tpu_custom_call.1} parent=1 // pred_check
      _
    $region11: #{tpu_custom_call.1} parent=1 // pred_check_branch
      %26 = sbr.rel (0) target = $region13
    $region12: #{tpu_custom_call.1} parent=1 // pred_region
      _
    $region13: #{tpu_custom_call.1} parent=1 // pred_fallthru
      _
    // Predicated region
    $region14: #{tpu_custom_call.1} parent=1 // pred_check
      _
    $region15: #{tpu_custom_call.1} parent=1 // pred_check_branch
      %28 = sbr.rel (0) target = $region17
    $region16: #{tpu_custom_call.1} parent=1 // pred_region
      %30 = dma.done [#allocation3], 3072
    $region17: #{tpu_custom_call.1} parent=1 // pred_fallthru
      _
    %v31 = vld [vmem:[#allocation2] sm:$0xf]
    %v32 = vld [vmem:[#allocation2 + $0x4] sm:$0xf]
    %v33 = vld [vmem:[#allocation2 + $0x8] sm:$0xf]
    %v34 = vld [vmem:[#allocation2 + $0xc] sm:$0xf]
    %v35 = vld [vmem:[#allocation2 + $0x10] sm:$0xf]
    %v36 = vld [vmem:[#allocation2 + $0x14] sm:$0xf]
    %v37 = vld [vmem:[#allocation2 + $0x18] sm:$0xf]
    %v38 = vld [vmem:[#allocation2 + $0x1c] sm:$0xf]
    %v39 = vld [vmem:[#allocation2 + $0x20] sm:$0xf]
    %v40 = vld [vmem:[#allocation2 + $0x24] sm:$0xf]
    %v41 = vld [vmem:[#allocation2 + $0x28] sm:$0xf]
    %v42 = vld [vmem:[#allocation2 + $0x2c] sm:$0xf]
    %v43 = vld [vmem:[#allocation2 + $0x30] sm:$0xf]
    %v44 = vld [vmem:[#allocation2 + $0x34] sm:$0xf]
    %v45 = vld [vmem:[#allocation2 + $0x38] sm:$0xf]
    %v46 = vld [vmem:[#allocation2 + $0x3c] sm:$0xf]
    %v47 = vld [vmem:[#allocation2 + $0x40] sm:$0xf]
    %v48 = vld [vmem:[#allocation2 + $0x44] sm:$0xf]
    %v49 = vld [vmem:[#allocation2 + $0x48] sm:$0xf]
    %v50 = vld [vmem:[#allocation2 + $0x4c] sm:$0xf]
    %v51 = vld [vmem:[#allocation2 + $0x50] sm:$0xf]
    %v52 = vld [vmem:[#allocation2 + $0x54] sm:$0xf]
    %v53 = vld [vmem:[#allocation2 + $0x58] sm:$0xf]
    %v54 = vld [vmem:[#allocation2 + $0x5c] sm:$0xf]
    %v55 = vld [vmem:[#allocation2 + $0x60] sm:$0xf]
    %v56 = vld [vmem:[#allocation2 + $0x64] sm:$0xf]
    %v57 = vld [vmem:[#allocation2 + $0x68] sm:$0xf]
    %v58 = vld [vmem:[#allocation2 + $0x6c] sm:$0xf]
    %v59 = vld [vmem:[#allocation2 + $0x70] sm:$0xf]
    %v60 = vld [vmem:[#allocation2 + $0x74] sm:$0xf]
    %v61 = vld [vmem:[#allocation2 + $0x78] sm:$0xf]
    %v62 = vld [vmem:[#allocation2 + $0x7c] sm:$0xf]
    %v63 = vld [vmem:[#allocation2 + $0x80] sm:$0xf]
    %v64 = vld [vmem:[#allocation2 + $0x84] sm:$0xf]
    %v65 = vld [vmem:[#allocation2 + $0x88] sm:$0xf]
    %v66 = vld [vmem:[#allocation2 + $0x8c] sm:$0xf]
    %v67 = vld [vmem:[#allocation2 + $0x90] sm:$0xf]
    %v68 = vld [vmem:[#allocation2 + $0x94] sm:$0xf]
    %v69 = vld [vmem:[#allocation2 + $0x98] sm:$0xf]
    %v70 = vld [vmem:[#allocation2 + $0x9c] sm:$0xf]
    %v71 = vld [vmem:[#allocation2 + $0xa0] sm:$0xf]
    %v72 = vld [vmem:[#allocation2 + $0xa4] sm:$0xf]
    %v73 = vld [vmem:[#allocation2 + $0xa8] sm:$0xf]
    %v74 = vld [vmem:[#allocation2 + $0xac] sm:$0xf]
    %v75 = vld [vmem:[#allocation2 + $0xb0] sm:$0xf]
    %v76 = vld [vmem:[#allocation2 + $0xb4] sm:$0xf]
    %v77 = vld [vmem:[#allocation2 + $0xb8] sm:$0xf]
    %v78 = vld [vmem:[#allocation2 + $0xbc] sm:$0xf]
    %v79 = vld [vmem:[%s2] sm:$0x1]
    %v80 = vld [vmem:[%s2 + $0x1] sm:$0x1]
    %v81 = vld [vmem:[%s2 + $0x2] sm:$0x1]
    %v82 = vld [vmem:[%s0] sm:$0xff]
    %v83 = vld [vmem:[%s0 + $0x8] sm:$0xff]
    %v84 = vld [vmem:[%s0 + $0x10] sm:$0xff]
    %v85 = vld [vmem:[%s0 + $0x18] sm:$0xff]
    %v86 = vld [vmem:[%s0 + $0x20] sm:$0xff]
    %v87 = vld [vmem:[%s0 + $0x28] sm:$0xff]
    %v88 = vld [vmem:[%s0 + $0x30] sm:$0xff]
    %v89 = vld [vmem:[%s0 + $0x38] sm:$0xff]
    %v90 = vld [vmem:[%s0 + $0x40] sm:$0xff]
    %v91 = vld [vmem:[%s0 + $0x48] sm:$0xff]
    %v92 = vld [vmem:[%s0 + $0x50] sm:$0xff]
    %v93 = vld [vmem:[%s0 + $0x58] sm:$0xff]
    %v94 = vld [vmem:[%s0 + $0x60] sm:$0xff]
    %v95 = vld [vmem:[%s0 + $0x68] sm:$0xff]
    %v96 = vld [vmem:[%s0 + $0x70] sm:$0xff]
    %v97 = vld [vmem:[%s0 + $0x78] sm:$0xff]
    %98 = vxpose.xlu0.b32.start [1/16] %v82, 128
    %99 = vxpose.xlu0.b32.cont [2/16] %v83, 128
    %100 = vxpose.xlu0.b32.cont [3/16] %v84, 128
    %101 = vxpose.xlu0.b32.cont [4/16] %v85, 128
    %102 = vxpose.xlu0.b32.cont [5/16] %v86, 128
    %103 = vxpose.xlu0.b32.cont [6/16] %v87, 128
    %104 = vxpose.xlu0.b32.cont [7/16] %v88, 128
    %105 = vxpose.xlu0.b32.cont [8/16] %v89, 128
    %106 = vxpose.xlu0.b32.cont [9/16] %v90, 128
    %107 = vxpose.xlu0.b32.cont [10/16] %v91, 128
    %108 = vxpose.xlu0.b32.cont [11/16] %v92, 128
    %109 = vxpose.xlu0.b32.cont [12/16] %v93, 128
    %110 = vxpose.xlu0.b32.cont [13/16] %v94, 128
    %111 = vxpose.xlu0.b32.cont [14/16] %v95, 128
    %112 = vxpose.xlu0.b32.cont [15/16] %v96, 128
    %113 = vxpose.xlu0.b32.end [16/16] %v97, 128
    %v114 = vpop.trf.xlu0
    %v115 = vpop.trf.xlu0
    %v116 = vpop.trf.xlu0
    %v117 = vpop.trf.xlu0
    %v118 = vpop.trf.xlu0
    %v119 = vpop.trf.xlu0
    %v120 = vpop.trf.xlu0
    %v121 = vpop.trf.xlu0
    %v122 = vpop.trf.xlu0
    %v123 = vpop.trf.xlu0
    %v124 = vpop.trf.xlu0
    %v125 = vpop.trf.xlu0
    %v126 = vpop.trf.xlu0
    %v127 = vpop.trf.xlu0
    %v128 = vpop.trf.xlu0
    %v129 = vpop.trf.xlu0
    %v130 = vmax.f32 %v114, 0.0
    %v131 = vpack.c.bf16 %v130, %v130
    %v132 = vperm.slane %v79, 0
    %v149 = vunpack.c.l.b16 %v31
    %v150 = vunpack.c.l.b16 %v32
    %v151 = vunpack.c.l.b16 %v33
    %v152 = vunpack.c.l.b16 %v34
    %v153 = vunpack.c.l.b16 %v35
    %v154 = vunpack.c.l.b16 %v36
    %v155 = vunpack.c.l.b16 %v37
    %v156 = vunpack.c.l.b16 %v38
    %v157 = vunpack.c.l.b16 %v39
    %v158 = vunpack.c.l.b16 %v40
    %v159 = vunpack.c.l.b16 %v41
    %v160 = vunpack.c.l.b16 %v42
    %v161 = vunpack.c.l.b16 %v43
    %v162 = vunpack.c.l.b16 %v44
    %v163 = vunpack.c.l.b16 %v45
    %v164 = vunpack.c.l.b16 %v46
    %v165 = vpack.c.b16 %v150, %v149
    %v166 = vpack.c.b16 %v152, %v151
    %v167 = vpack.c.b16 %v154, %v153
    %v168 = vpack.c.b16 %v156, %v155
    %v169 = vpack.c.b16 %v158, %v157
    %v170 = vpack.c.b16 %v160, %v159
    %v171 = vpack.c.b16 %v162, %v161
    %v172 = vpack.c.b16 %v164, %v163
    %181 = vmatpush.bf16.msra.mxu0 %v172
    %182 = vmatpush.bf16.msra.mxu0 %v171
    %183 = vmatpush.bf16.msra.mxu0 %v170
    %184 = vmatpush.bf16.msra.mxu0 %v169
    %185 = vmatpush.bf16.msra.mxu0 %v168
    %186 = vmatpush.bf16.msra.mxu0 %v167
    %187 = vmatpush.bf16.msra.mxu0 %v166
    %188 = vmatpush.bf16.msra.mxu0 %v165
    %189 = vmatmul.bf16.gmra.mxu0 %v131
    %v190 = vpop.f32.mrf.mxu0
    %v191 = vadd.f32 %v132, %v190
    %v192 = vpop.f32.mrf.mxu0
    %193 = vdwg.mxu0
    %v194 = vmax.f32 %v191, 0.0
    %v195 = vpack.c.bf16 %v194, %v194
    %v196 = vperm.slane %v80, 0
    %v213 = vunpack.c.l.b16 %v47
    %v214 = vunpack.c.l.b16 %v48
    %v215 = vunpack.c.l.b16 %v49
    %v216 = vunpack.c.l.b16 %v50
    %v217 = vunpack.c.l.b16 %v51
    %v218 = vunpack.c.l.b16 %v52
    %v219 = vunpack.c.l.b16 %v53
    %v220 = vunpack.c.l.b16 %v54
    %v221 = vunpack.c.l.b16 %v55
    %v222 = vunpack.c.l.b16 %v56
    %v223 = vunpack.c.l.b16 %v57
    %v224 = vunpack.c.l.b16 %v58
    %v225 = vunpack.c.l.b16 %v59
    %v226 = vunpack.c.l.b16 %v60
    %v227 = vunpack.c.l.b16 %v61
    %v228 = vunpack.c.l.b16 %v62
    %v229 = vpack.c.b16 %v214, %v213
    %v230 = vpack.c.b16 %v216, %v215
    %v231 = vpack.c.b16 %v218, %v217
    %v232 = vpack.c.b16 %v220, %v219
    %v233 = vpack.c.b16 %v222, %v221
    %v234 = vpack.c.b16 %v224, %v223
    %v235 = vpack.c.b16 %v226, %v225
    %v236 = vpack.c.b16 %v228, %v227
    %245 = vmatpush.bf16.msra.mxu0 %v236
    %246 = vmatpush.bf16.msra.mxu0 %v235
    %247 = vmatpush.bf16.msra.mxu0 %v234
    %248 = vmatpush.bf16.msra.mxu0 %v233
    %249 = vmatpush.bf16.msra.mxu0 %v232
    %250 = vmatpush.bf16.msra.mxu0 %v231
    %251 = vmatpush.bf16.msra.mxu0 %v230
    %252 = vmatpush.bf16.msra.mxu0 %v229
    %253 = vmatmul.bf16.gmra.mxu0 %v195
    %v254 = vpop.f32.mrf.mxu0
    %v255 = vadd.f32 %v196, %v254
    %v256 = vpop.f32.mrf.mxu0
    %257 = vdwg.mxu0
    %v258 = vpack.c.bf16 %v255, %v255
    %v259 = vperm.slane %v81, 0
    %v276 = vunpack.c.l.b16 %v63
    %v277 = vunpack.c.l.b16 %v64
    %v278 = vunpack.c.l.b16 %v65
    %v279 = vunpack.c.l.b16 %v66
    %v280 = vunpack.c.l.b16 %v67
    %v281 = vunpack.c.l.b16 %v68
    %v282 = vunpack.c.l.b16 %v69
    %v283 = vunpack.c.l.b16 %v70
    %v284 = vunpack.c.l.b16 %v71
    %v285 = vunpack.c.l.b16 %v72
    %v286 = vunpack.c.l.b16 %v73
    %v287 = vunpack.c.l.b16 %v74
    %v288 = vunpack.c.l.b16 %v75
    %v289 = vunpack.c.l.b16 %v76
    %v290 = vunpack.c.l.b16 %v77
    %v291 = vunpack.c.l.b16 %v78
    %v292 = vpack.c.b16 %v277, %v276
    %v293 = vpack.c.b16 %v279, %v278
    %v294 = vpack.c.b16 %v281, %v280
    %v295 = vpack.c.b16 %v283, %v282
    %v296 = vpack.c.b16 %v285, %v284
    %v297 = vpack.c.b16 %v287, %v286
    %v298 = vpack.c.b16 %v289, %v288
    %v299 = vpack.c.b16 %v291, %v290
    %308 = vmatpush.bf16.msra.mxu0 %v299
    %309 = vmatpush.bf16.msra.mxu0 %v298
    %310 = vmatpush.bf16.msra.mxu0 %v297
    %311 = vmatpush.bf16.msra.mxu0 %v296
    %312 = vmatpush.bf16.msra.mxu0 %v295
    %313 = vmatpush.bf16.msra.mxu0 %v294
    %314 = vmatpush.bf16.msra.mxu0 %v293
    %315 = vmatpush.bf16.msra.mxu0 %v292
    %316 = vmatmul.bf16.gmra.mxu0 %v258
    %v317 = vpop.f32.mrf.mxu0
    %v318 = vadd.f32 %v259, %v317
    %v319 = vpop.f32.mrf.mxu0
    %320 = vdwg.mxu0
    %v321 = vlaneseq
    %v322 = vand.u32 %v321, 127
    %vm323 = vcmp.lt.s32.totalorder %v322, 6
    %vm324 = vcmp.ge.s32.totalorder %v322, 6
    %vm325 = vcmp.lt.s32.totalorder %v322, 12
    %vm326 = vmand %vm324, %vm325
    %vm327 = vmor %vm323, %vm326
    %v328 = vsel %vm323, %v318, -1e+30
    %329 = vmax.xlane.f32.xlu0 %v328
    %v330 = vpop.xlane.xlu0 %329
    %v331 = vsel %vm326, %v318, -1e+30
    %332 = vmax.xlane.f32.xlu0 %v331
    %v333 = vpop.xlane.xlu0 %332
    %v334 = vsel %vm323, %v330, %v333
    %v335 = vsub.f32 %v318, %v334
    %v336 = vsel %vm327, %v335, -1e+30
    %v337 = vmul.f32 %v336, 1.442695
    %v338 = vpow.pop %v337
    %v339 = vsel %vm323, %v338, 0.0
    %340 = vadd.xlane.f32.xlu0 %v339
    %v341 = vpop.xlane.xlu0 %340
    %v342 = vsel %vm326, %v338, 0.0
    %343 = vadd.xlane.f32.xlu0 %v342
    %v344 = vpop.xlane.xlu0 %343
    %v345 = vsel %vm323, %v341, %v344
    %v346 = vrcp.pop %v345
    %v347 = vmul.f32 %v338, %v346
    %348 = vst [vmem:[#allocation5] sm:$0xff] %v347
    // Predicated region
    $region18: #{tpu_custom_call.1} parent=1 // pred_check
      _
    $region19: #{tpu_custom_call.1} parent=1 // pred_check_branch
      %350 = sbr.rel (0) target = $region21
    $region20: #{tpu_custom_call.1} parent=1 // pred_region
      %352 = vsyncadd [#allocation4], 0
      %s354 = sshll.u32 [#allocation5], 4
      %s355 = int_to_ptr.vmem [resolvable:$true] %s354
      %s356 = sshll.u32 %s3, 4
      %s357 = int_to_ptr.hbm [resolvable:$true] %s356
      %359 = dma.vmem_to_hbm [thread:$0]  %s355, 128, %s357, [#allocation4]
    $region21: #{tpu_custom_call.1} parent=1 // pred_fallthru
      _
    // Predicated region
    $region22: #{tpu_custom_call.1} parent=1 // pred_check
      _
    $region23: #{tpu_custom_call.1} parent=1 // pred_check_branch
      %361 = sbr.rel (0) target = $region25
    $region24: #{tpu_custom_call.1} parent=1 // pred_region
      %363 = dma.done [#allocation4], 128
    $region25: #{tpu_custom_call.1} parent=1 // pred_fallthru
      _
    %364 = vsyncpa [#allocation3], 1
    %365 = vsyncpa [#allocation4], 1

</llo_original>
